<compile_context>
chip_gen: v6e
topology: v6e:2x2x1
jax: 0.10.0
libtpu: 0.0.40
codegen_flags: <defaults>
</compile_context>

<pallas_src>
import functools

import jax
import jax.numpy as jnp
from jax import lax
from jax.experimental import pallas as pl
from jax.experimental.pallas import tpu as pltpu


def _channel_attention_kernel(x_ref, w1t_ref, w2t_ref, o_ref,
                              sum_acc, max_acc,
                              *, hw_total, tile_hw, acc_lanes):
    """Grid = (batch tiles, spatial tiles); spatial axis is the reduction axis.

    x_ref:   (tile_n, C, tile_hw)   current spatial slab (native dtype)
    w1t_ref: (C, C_hid)             fc1 weight, pre-transposed
    w2t_ref: (C_hid, C)             fc2 weight, pre-transposed
    o_ref:   (tile_n, C)            sigmoid(MLP(avg) + MLP(max))
    sum_acc: (tile_n, C, acc_lanes) f32 running spatial sum (lane-partial)
    max_acc: (tile_n, C, acc_lanes) f32 running spatial max (lane-partial)
    """
    hw_idx = pl.program_id(1)

    @pl.when(hw_idx == 0)
    def _init():
        sum_acc[...] = jnp.zeros(sum_acc.shape, sum_acc.dtype)
        max_acc[...] = jnp.full(max_acc.shape, -jnp.inf, max_acc.dtype)

    x = x_ref[...]                                    # (tile_n, C, tile_hw)
    num_chunks = tile_hw // acc_lanes                 # static
    needs_mask = (hw_total % tile_hw) != 0            # static
    hw_base = hw_idx * tile_hw

    # Lane-aligned chunk accumulation: per-element work is plain VPU adds/maxes;
    # no per-tile cross-lane reduce (that is deferred to the finalize step).
    psum = None
    pmax = None
    for k in range(num_chunks):                       # static, vreg-aligned slices
        sl = x[:, :, k * acc_lanes:(k + 1) * acc_lanes]
        if needs_mask:
            pos = hw_base + k * acc_lanes + lax.broadcasted_iota(
                jnp.int32, sl.shape, 2)
            valid = pos < hw_total
            s_in = jnp.where(valid, sl, 0.0).astype(jnp.float32)
            m_in = jnp.where(valid, sl, float("-inf")).astype(jnp.float32)
        else:
            s_in = sl.astype(jnp.float32)
            m_in = s_in
        psum = s_in if psum is None else psum + s_in
        pmax = m_in if pmax is None else jnp.maximum(pmax, m_in)

    sum_acc[...] = sum_acc[...] + psum
    max_acc[...] = jnp.maximum(max_acc[...], pmax)

    @pl.when(hw_idx == pl.num_programs(1) - 1)
    def _finalize():
        # Single small cross-lane reduce per batch tile.
        avg = jnp.sum(sum_acc[...], axis=-1) * (1.0 / hw_total)   # (tile_n, C)
        mx = jnp.max(max_acc[...], axis=-1)                       # (tile_n, C)
        # Fused shared MLP: stack avg/max rows -> one fc1, one relu, one fc2.
        pooled = jnp.concatenate([avg, mx], axis=0)               # (2*tile_n, C)
        h = jnp.maximum(
            jnp.dot(pooled, w1t_ref[...], preferred_element_type=jnp.float32),
            0.0)                                                  # (2*tile_n, C_hid)
        y = jnp.dot(h, w2t_ref[...], preferred_element_type=jnp.float32)
        tn = avg.shape[0]
        o_ref[...] = jax.nn.sigmoid(y[:tn] + y[tn:]).astype(o_ref.dtype)


def channel_attention(x_nchw, w1, w2, *, tile_n=None, tile_hw=None,
                      x_block_target_bytes=4 * 1024 * 1024):
    """x_nchw: (N, C, H, W); w1: (C_hid, C); w2: (C, C_hid). Returns (N, C, 1, 1)."""
    N, C, H, W = x_nchw.shape
    C_hid, C_in = w1.shape
    assert C_in == C and w2.shape == (C, C_hid)
    HW = H * W

    x_flat = x_nchw.reshape(N, C, HW)        # free: no data movement
    w1t = jnp.transpose(w1)                  # (C, C_hid)
    w2t = jnp.transpose(w2)                  # (C_hid, C)

    itemsize = x_flat.dtype.itemsize

    # --- tile selection (VMEM-budget driven, safe on v5e/v6e/v7x) -------------
    if tile_n is None:
        tile_n = min(N, 8)
        # keep each (tile_n, C, 128) f32 accumulator under ~4 MiB for large C
        tile_n = max(1, min(tile_n, (4 * 1024 * 1024) // max(1, C * 128 * 4)))
    tile_n = max(1, min(tile_n, N))

    if tile_hw is None:
        budget_rows = max(128, x_block_target_bytes // max(1, tile_n * C * itemsize))
        if HW <= budget_rows:
            tile_hw = HW
        else:
            tile_hw = max(128, (budget_rows // 128) * 128)
    tile_hw = min(tile_hw, HW)
    # Lane (last-dim) block constraint: multiple of 128 or equal to full HW.
    assert tile_hw == HW or tile_hw % 128 == 0, (tile_hw, HW)

    acc_lanes = 128 if tile_hw % 128 == 0 else tile_hw

    grid = (pl.cdiv(N, tile_n), pl.cdiv(HW, tile_hw))

    # Explicit VMEM limit: double-buffered x + accumulators + weights + output.
    vmem_est = (2 * tile_n * C * tile_hw * itemsize
                + 2 * tile_n * C * acc_lanes * 4
                + 2 * (C * C_hid + C_hid * C) * w1t.dtype.itemsize
                + 2 * tile_n * C * itemsize)
    vmem_limit = int(min(48 * 1024 * 1024,
                         max(vmem_est + (2 << 20), 16 * 1024 * 1024)))

    kernel = functools.partial(_channel_attention_kernel,
                               hw_total=HW, tile_hw=tile_hw, acc_lanes=acc_lanes)

    cost = pl.CostEstimate(
        flops=2 * N * C * HW + 8 * N * C * C_hid,
        transcendentals=N * C,
        bytes_accessed=(N * C * HW * itemsize + N * C * itemsize
                        + 2 * C * C_hid * w1t.dtype.itemsize),
    )

    out = pl.pallas_call(
        kernel,
        out_shape=jax.ShapeDtypeStruct((N, C), x_nchw.dtype),
        grid=grid,
        in_specs=[
            pl.BlockSpec((tile_n, C, tile_hw), lambda n, hw: (n, 0, hw)),
            pl.BlockSpec((C, C_hid), lambda n, hw: (0, 0)),   # tiny, untiled
            pl.BlockSpec((C_hid, C), lambda n, hw: (0, 0)),   # tiny, untiled
        ],
        out_specs=pl.BlockSpec((tile_n, C), lambda n, hw: (n, 0)),
        scratch_shapes=[
            pltpu.VMEM((tile_n, C, acc_lanes), jnp.float32),  # running sum
            pltpu.VMEM((tile_n, C, acc_lanes), jnp.float32),  # running max
        ],
        compiler_params=pltpu.CompilerParams(
            dimension_semantics=("parallel", "arbitrary"),
            vmem_limit_bytes=vmem_limit),
        cost_estimate=cost,
    )(x_flat, w1t, w2t)

    return out.reshape(N, C, 1, 1)


def channel_attention_ref(x_nchw, w1, w2):
    """Pure-JAX reference mirroring the PyTorch module."""
    avg = jnp.mean(x_nchw, axis=(2, 3))                  # (N, C)
    mx = jnp.max(x_nchw, axis=(2, 3))                    # (N, C)

    def mlp(v):
        h = jnp.maximum(v @ w1.T, 0.0)                   # (N, C_hid)
        return h @ w2.T                                  # (N, C)

    out = jax.nn.sigmoid(mlp(avg) + mlp(mx))
    return out.reshape(*out.shape, 1, 1)


if __name__ == "__main__":
    # in_channels must be divisible by ratio=16.
    N, C, ratio = 2, 64, 16
    C_hid = C // ratio

    key = jax.random.PRNGKey(0)
    kx1, kx2, k1, k2 = jax.random.split(key, 4)

    # Conv2d 1x1, no bias -> 2D matrices.
    w1 = jax.random.normal(k1, (C_hid, C), dtype=jnp.float32) * 0.1   # fc1
    w2 = jax.random.normal(k2, (C, C_hid), dtype=jnp.float32) * 0.1   # fc2

    # Case 1: H*W = 256 divisible by the spatial tile -> multi-tile accumulation.
    x1 = jax.random.normal(kx1, (N, C, 16, 16), dtype=jnp.float32)
    y1 = jax.block_until_ready(channel_attention(x1, w1, w2, tile_hw=128))
    assert y1.shape == (N, C, 1, 1)
    assert jnp.allclose(y1, channel_attention_ref(x1, w1, w2),
                        atol=1e-5, rtol=1e-5), "mismatch vs reference (case 1)"

    # Case 2: H*W = 144 not divisible by the tile -> exercises the mask path.
    x2 = jax.random.normal(kx2, (N, C, 12, 12), dtype=jnp.float32)
    y2 = jax.block_until_ready(channel_attention(x2, w1, w2, tile_hw=128))
    assert y2.shape == (N, C, 1, 1)
    assert jnp.allclose(y2, channel_attention_ref(x2, w1, w2),
                        atol=1e-5, rtol=1e-5), "mismatch vs reference (case 2)"

    print("KERNEL_OK")
</pallas_src>

<mosaic_0001>
module attributes {stable_mosaic.version = 11 : i64} {
  func.func @_channel_attention_kernel(%arg0: i32, %arg1: i32, %arg2: memref<2x64x128xf32, #tpu.memory_space<vmem>>, %arg3: memref<64x4xf32, #tpu.memory_space<vmem>>, %arg4: memref<4x64xf32, #tpu.memory_space<vmem>>, %arg5: memref<2x64xf32, #tpu.memory_space<vmem>>, %arg6: memref<2x64x128xf32, #tpu.memory_space<vmem>>, %arg7: memref<2x64x128xf32, #tpu.memory_space<vmem>>) attributes {dimension_semantics = [#tpu.dimension_semantics<parallel>, #tpu.dimension_semantics<arbitrary>], iteration_bounds = array<i64: 1, 2>, scalar_prefetch = 0 : i64, scratch_operands = 2 : i64, tpu.core_type = #tpu.core_type<tc>, window_params = [{transform_indices = @transform_0, window_bounds = array<i64: 2, 64, 128>}, {pipeline_mode = #tpu.pipeline_mode<synchronous>, transform_indices = @transform_1, window_bounds = array<i64: 64, 4>}, {pipeline_mode = #tpu.pipeline_mode<synchronous>, transform_indices = @transform_2, window_bounds = array<i64: 4, 64>}, {transform_indices = @transform_3, window_bounds = array<i64: 2, 64>}]} {
    %c0_i32 = arith.constant 0 : i32
    %0 = arith.cmpi eq, %arg1, %c0_i32 : i32
    %1 = arith.extui %0 : i1 to i32
    %c0_i32_0 = arith.constant 0 : i32
    %2 = arith.cmpi ne, %1, %c0_i32_0 : i32
    scf.if %2 {
      %cst = arith.constant 0.000000e+00 : f32
      %13 = vector.broadcast %cst : f32 to vector<2x64x128xf32>
      %c0_16 = arith.constant 0 : index
      %c0_17 = arith.constant 0 : index
      %c0_18 = arith.constant 0 : index
      %14 = vector.load %arg6[%c0_16, %c0_17, %c0_18] : memref<2x64x128xf32, #tpu.memory_space<vmem>>, vector<2x64x128xf32>
      tpu.vector_store %arg6[%c0_16, %c0_17, %c0_18], %13 {strides = array<i32>} : memref<2x64x128xf32, #tpu.memory_space<vmem>>, vector<2x64x128xf32>,
      %cst_19 = arith.constant 0xFF800000 : f32
      %15 = vector.broadcast %cst_19 : f32 to vector<2x64x128xf32>
      %c0_20 = arith.constant 0 : index
      %c0_21 = arith.constant 0 : index
      %c0_22 = arith.constant 0 : index
      %16 = vector.load %arg7[%c0_20, %c0_21, %c0_22] : memref<2x64x128xf32, #tpu.memory_space<vmem>>, vector<2x64x128xf32>
      tpu.vector_store %arg7[%c0_20, %c0_21, %c0_22], %15 {strides = array<i32>} : memref<2x64x128xf32, #tpu.memory_space<vmem>>, vector<2x64x128xf32>,
    } else {
    }
    %c0 = arith.constant 0 : index
    %c0_1 = arith.constant 0 : index
    %c0_2 = arith.constant 0 : index
    %3 = vector.load %arg2[%c0, %c0_1, %c0_2] : memref<2x64x128xf32, #tpu.memory_space<vmem>>, vector<2x64x128xf32>
    %c0_3 = arith.constant 0 : index
    %c0_4 = arith.constant 0 : index
    %c0_5 = arith.constant 0 : index
    %4 = vector.load %arg6[%c0_3, %c0_4, %c0_5] : memref<2x64x128xf32, #tpu.memory_space<vmem>>, vector<2x64x128xf32>
    %5 = arith.addf %4, %3 : vector<2x64x128xf32>
    %c0_6 = arith.constant 0 : index
    %c0_7 = arith.constant 0 : index
    %c0_8 = arith.constant 0 : index
    %6 = vector.load %arg6[%c0_6, %c0_7, %c0_8] : memref<2x64x128xf32, #tpu.memory_space<vmem>>, vector<2x64x128xf32>
    tpu.vector_store %arg6[%c0_6, %c0_7, %c0_8], %5 {strides = array<i32>} : memref<2x64x128xf32, #tpu.memory_space<vmem>>, vector<2x64x128xf32>,
    %c0_9 = arith.constant 0 : index
    %c0_10 = arith.constant 0 : index
    %c0_11 = arith.constant 0 : index
    %7 = vector.load %arg7[%c0_9, %c0_10, %c0_11] : memref<2x64x128xf32, #tpu.memory_space<vmem>>, vector<2x64x128xf32>
    %8 = arith.maximumf %7, %3 : vector<2x64x128xf32>
    %c0_12 = arith.constant 0 : index
    %c0_13 = arith.constant 0 : index
    %c0_14 = arith.constant 0 : index
    %9 = vector.load %arg7[%c0_12, %c0_13, %c0_14] : memref<2x64x128xf32, #tpu.memory_space<vmem>>, vector<2x64x128xf32>
    tpu.vector_store %arg7[%c0_12, %c0_13, %c0_14], %8 {strides = array<i32>} : memref<2x64x128xf32, #tpu.memory_space<vmem>>, vector<2x64x128xf32>,
    %c1_i32 = arith.constant 1 : i32
    %10 = arith.cmpi eq, %arg1, %c1_i32 : i32
    %11 = arith.extui %10 : i1 to i32
    %c0_i32_15 = arith.constant 0 : i32
    %12 = arith.cmpi ne, %11, %c0_i32_15 : i32
    scf.if %12 {
      %c0_16 = arith.constant 0 : index
      %c0_17 = arith.constant 0 : index
      %c0_18 = arith.constant 0 : index
      %13 = vector.load %arg6[%c0_16, %c0_17, %c0_18] : memref<2x64x128xf32, #tpu.memory_space<vmem>>, vector<2x64x128xf32>
      %cst = arith.constant dense<0.000000e+00> : vector<2x64xf32>
      %14 = vector.multi_reduction <add>, %13, %cst [2] : vector<2x64x128xf32> to vector<2x64xf32>
      %cst_19 = arith.constant 3.906250e-03 : f32
      %15 = vector.broadcast %cst_19 : f32 to vector<2x64xf32>
      %16 = arith.mulf %14, %15 : vector<2x64xf32>
      %c0_20 = arith.constant 0 : index
      %c0_21 = arith.constant 0 : index
      %c0_22 = arith.constant 0 : index
      %17 = vector.load %arg7[%c0_20, %c0_21, %c0_22] : memref<2x64x128xf32, #tpu.memory_space<vmem>>, vector<2x64x128xf32>
      %cst_23 = arith.constant dense<0xFF800000> : vector<2x64xf32>
      %18 = vector.multi_reduction <maximumf>, %17, %cst_23 [2] : vector<2x64x128xf32> to vector<2x64xf32>
      %19 = tpu.concatenate %16, %18 in 0 : vector<2x64xf32>, vector<2x64xf32> -> vector<4x64xf32>
      %c0_24 = arith.constant 0 : index
      %c0_25 = arith.constant 0 : index
      %20 = vector.load %arg3[%c0_24, %c0_25] : memref<64x4xf32, #tpu.memory_space<vmem>>, vector<64x4xf32>
      %cst_26 = arith.constant dense<0.000000e+00> : vector<4x4xf32>
      %21 = tpu.matmul %19, %20, %cst_26 {dimension_numbers = #tpu.dot_dimension_numbers<[1], [0], [0], [1], [0, 0, 1, 1], [], []>} : vector<4x64xf32>, vector<64x4xf32>, vector<4x4xf32> -> vector<4x4xf32>
      %cst_27 = arith.constant 0.000000e+00 : f32
      %22 = vector.broadcast %cst_27 : f32 to vector<4x4xf32>
      %23 = arith.maximumf %21, %22 : vector<4x4xf32>
      %c0_28 = arith.constant 0 : index
      %c0_29 = arith.constant 0 : index
      %24 = vector.load %arg4[%c0_28, %c0_29] : memref<4x64xf32, #tpu.memory_space<vmem>>, vector<4x64xf32>
      %cst_30 = arith.constant dense<0.000000e+00> : vector<4x64xf32>
      %25 = tpu.matmul %23, %24, %cst_30 {dimension_numbers = #tpu.dot_dimension_numbers<[1], [0], [0], [1], [0, 0, 1, 1], [], []>} : vector<4x4xf32>, vector<4x64xf32>, vector<4x64xf32> -> vector<4x64xf32>
      %26 = vector.extract_strided_slice %25 {offsets = [0, 0], sizes = [2, 64], strides = [1, 1]} : vector<4x64xf32> to vector<2x64xf32>
      %27 = vector.extract_strided_slice %25 {offsets = [2, 0], sizes = [2, 64], strides = [1, 1]} : vector<4x64xf32> to vector<2x64xf32>
      %28 = arith.addf %26, %27 : vector<2x64xf32>
      %29 = arith.negf %28 : vector<2x64xf32>
      %30 = math.exp %29 : vector<2x64xf32>
      %cst_31 = arith.constant 1.000000e+00 : f32
      %31 = vector.broadcast %cst_31 : f32 to vector<2x64xf32>
      %32 = arith.addf %31, %30 : vector<2x64xf32>
      %33 = arith.divf %31, %32 : vector<2x64xf32>
      %c0_32 = arith.constant 0 : index
      %c0_33 = arith.constant 0 : index
      %34 = vector.load %arg5[%c0_32, %c0_33] : memref<2x64xf32, #tpu.memory_space<vmem>>, vector<2x64xf32>
      tpu.vector_store %arg5[%c0_32, %c0_33], %33 {strides = array<i32>} : memref<2x64xf32, #tpu.memory_space<vmem>>, vector<2x64xf32>,
    } else {
    }
    return
  }
  func.func @transform_0(%arg0: i32, %arg1: i32) -> (i32, i32, i32) {
    %c0_i32 = arith.constant 0 : i32
    %c0_i32_0 = arith.constant 0 : i32
    return %arg0, %c0_i32, %arg1 : i32, i32, i32
  }
  func.func @transform_1(%arg0: i32, %arg1: i32) -> (i32, i32) {
    %c0_i32 = arith.constant 0 : i32
    %c0_i32_0 = arith.constant 0 : i32
    %c0_i32_1 = arith.constant 0 : i32
    return %c0_i32, %c0_i32_0 : i32, i32
  }
  func.func @transform_2(%arg0: i32, %arg1: i32) -> (i32, i32) {
    %c0_i32 = arith.constant 0 : i32
    %c0_i32_0 = arith.constant 0 : i32
    %c0_i32_1 = arith.constant 0 : i32
    return %c0_i32, %c0_i32_0 : i32, i32
  }
  func.func @transform_3(%arg0: i32, %arg1: i32) -> (i32, i32) {
    %c0_i32 = arith.constant 0 : i32
    %c0_i32_0 = arith.constant 0 : i32
    return %arg0, %c0_i32 : i32, i32
  }
}

</mosaic_0001>

<llo_original>
// kernel: tpu_custom_call.1
$region0: #{tpu_custom_call.1}
  #allocation0 [shape = 'u32[]', space=smem, size = 0x4, offset = 0x4, fixed_abs, tag = 'smem constant byte address 0x4 - core index']
  #allocation1 [shape = 'u32[144,128]{1,0:T(1,128)}', space=vmem, size = 0x12000, scoped, tag = 'internal scratch']
  #allocation2 [shape = 'f32[2,64,128]{2,1,0:T(8,128)}', space=vmem, size = 0x10000, scoped, tag = 'scratch operand']
  #allocation3 [shape = 'f32[2,64,128]{2,1,0:T(8,128)}', space=vmem, size = 0x10000, scoped, tag = 'scratch operand']
  %s0 = inlined_call_operand.hbm [shape: f32[2,64,256], index: 0, kind: input, shape index: {}]
  %s1 = inlined_call_operand.vmem [shape: f32[64,4], index: 1, kind: input, shape index: {}]
  %s2 = inlined_call_operand.vmem [shape: f32[4,64], index: 2, kind: input, shape index: {}]
  %s3 = inlined_call_operand.hbm [shape: f32[2,64], index: 3, kind: output, shape index: {}]
  %s4 = sld [smem:[#allocation0]]
  $region57: #{tpu_custom_call.1} parent=0
    _
  %s6 = ssub.s32 1, %s4
  %s7 = scalar_select 0, %s6, %s4
  $region1: #{tpu_custom_call.1} parent=0
    #allocation4 [shape = 'u8[131072]{0}', space=vmem, size = 0x20000, scoped, tag = 'input window, operand 0']
    #allocation5 [shape = 's32[2]{0}', space=sflag, size = 0x8, scoped, tag = 'scoped memory for tpu_custom_call.1']
    #allocation6 [shape = 's32[2]{0}', space=sflag, size = 0x8, scoped, tag = 'scoped memory for tpu_custom_call.1']
    #allocation7 [shape = 'u8[1024]{0}', space=vmem, size = 0x400, scoped, tag = 'output window, operand 0, single buffered']
    %8 = vsyncpa [#allocation5], 0
    %s9 = scalar_lea.sflag [#allocation5], 1
    %10 = vsyncpa %s9, 0
    %11 = vsyncpa [#allocation6], 0
    loop: start=0, step=1, limit=4
    $region2: #{tpu_custom_call.1} parent=1 // loop_pre_header
      _
    $region3: #{tpu_custom_call.1} parent=1 // loop_header
      %s13 = sphi 0, %s17
      %p14 = scmp.ge.s32.totalorder %s13, 4
      %s20 = sphi 0, %s32
      %s21 = sphi 0, %s28
      %s22 = sphi 0, %s20
      %s23 = sphi 0, %s21
      %s24 = sphi 0, %s22
      %s25 = sphi 0, %s23
      %s37 = sphi 0, %s39
      %s40 = sphi 0, %s37
      %s41 = sphi 0, %s40
      %s57 = sphi 0, %s41
      %s61 = sphi 0, %s61
      %s63 = sphi 0, %s61
      %s64 = sphi 0, %s63
      %s78 = sphi 0, %s64
      %s82 = sphi 0, %s82
      %s84 = sphi 0, %s82
      %s85 = sphi 0, %s84
      %s99 = sphi 0, %s85
      %s105 = sphi 0, %s107
      %s108 = sphi 0, %s105
      %s109 = sphi 0, %s108
      %s125 = sphi 0, %s109
    $region4: #{tpu_custom_call.1} parent=1 // loop_header_branch
      %16 = sbr.rel (%p14) target = $region8
    $region5: #{tpu_custom_call.1} parent=1 // loop_body
      %s18 = ssub.s32 %s13, 1
      %s19 = ssub.s32 %s13, 2
      %s26 = sadd.s32 1, %s21
      %p27 = scmp.ge.s32.totalorder %s26, 2
      %s28 = scalar_select %p27, 0, %s26
      %s29 = sadd.s32 1, %s20
      %s30 = scalar_select %p27, %s29, %s20
      %p31 = scmp.ge.s32.totalorder %s30, 1
      %s32 = scalar_select %p31, 0, %s30
      %s33 = ssub.s32 %s20, %s32
      %s34 = ssub.s32 %s21, %s28
      %s35 = sor.u32 %s33, %s34
      %p36 = scmp.eq.s32.totalorder %s35, 0
      %s38 = sadd.s32 %s37, 1
      %s39 = scalar_select %p36, %s37, %s38
      %p42 = pneg %p36
      %p43 = scmp.eq.s32.totalorder %s13, 1
      %p44 = por %p42, %p43
      %p45 = scmp.ne.s32.totalorder %s37, %s40
      %p46 = scmp.eq.s32.totalorder %s13, 0
      %p47 = por %p45, %p46
      %p48 = scmp.ne.s32.totalorder %s37, %s40
      %p49 = scmp.eq.s32.totalorder %s18, 1
      %p50 = por %p48, %p49
      %p51 = scmp.ne.s32.totalorder %s40, %s41
      %p52 = scmp.eq.s32.totalorder %s18, 0
      %p53 = por %p51, %p52
      %p54 = scmp.ne.s32.totalorder %s40, %s41
      %p55 = scmp.eq.s32.totalorder %s19, 1
      %p56 = por %p54, %p55
      %p58 = scmp.ne.s32.totalorder %s41, %s57
      %p59 = scmp.eq.s32.totalorder %s19, 0
      %p60 = por %p58, %p59
      %s62 = sadd.s32 %s61, 1
      %p65 = scmp.eq.s32.totalorder %s13, 1
      %p66 = scmp.ne.s32.totalorder %s61, %s63
      %p67 = scmp.eq.s32.totalorder %s13, 0
      %p68 = por %p66, %p67
      %p69 = scmp.ne.s32.totalorder %s61, %s63
      %p70 = scmp.eq.s32.totalorder %s18, 1
      %p71 = por %p69, %p70
      %p72 = scmp.ne.s32.totalorder %s63, %s64
      %p73 = scmp.eq.s32.totalorder %s18, 0
      %p74 = por %p72, %p73
      %p75 = scmp.ne.s32.totalorder %s63, %s64
      %p76 = scmp.eq.s32.totalorder %s19, 1
      %p77 = por %p75, %p76
      %p79 = scmp.ne.s32.totalorder %s64, %s78
      %p80 = scmp.eq.s32.totalorder %s19, 0
      %p81 = por %p79, %p80
      %s83 = sadd.s32 %s82, 1
      %p86 = scmp.eq.s32.totalorder %s13, 1
      %p87 = scmp.ne.s32.totalorder %s82, %s84
      %p88 = scmp.eq.s32.totalorder %s13, 0
      %p89 = por %p87, %p88
      %p90 = scmp.ne.s32.totalorder %s82, %s84
      %p91 = scmp.eq.s32.totalorder %s18, 1
      %p92 = por %p90, %p91
      %p93 = scmp.ne.s32.totalorder %s84, %s85
      %p94 = scmp.eq.s32.totalorder %s18, 0
      %p95 = por %p93, %p94
      %p96 = scmp.ne.s32.totalorder %s84, %s85
      %p97 = scmp.eq.s32.totalorder %s19, 1
      %p98 = por %p96, %p97
      %p100 = scmp.ne.s32.totalorder %s85, %s99
      %p101 = scmp.eq.s32.totalorder %s19, 0
      %p102 = por %p100, %p101
      %s103 = ssub.s32 %s20, %s32
      %p104 = scmp.eq.s32.totalorder %s103, 0
      %s106 = sadd.s32 %s105, 1
      %s107 = scalar_select %p104, %s105, %s106
      %p110 = pneg %p104
      %p111 = scmp.eq.s32.totalorder %s13, 1
      %p112 = por %p110, %p111
      %p113 = scmp.ne.s32.totalorder %s105, %s108
      %p114 = scmp.eq.s32.totalorder %s13, 0
      %p115 = por %p113, %p114
      %p116 = scmp.ne.s32.totalorder %s105, %s108
      %p117 = scmp.eq.s32.totalorder %s18, 1
      %p118 = por %p116, %p117
      %p119 = scmp.ne.s32.totalorder %s108, %s109
      %p120 = scmp.eq.s32.totalorder %s18, 0
      %p121 = por %p119, %p120
      %p122 = scmp.ne.s32.totalorder %s108, %s109
      %p123 = scmp.eq.s32.totalorder %s19, 1
      %p124 = por %p122, %p123
      %p126 = scmp.ne.s32.totalorder %s109, %s125
      %p127 = scmp.eq.s32.totalorder %s19, 0
      %p128 = por %p126, %p127
      %p129 = scmp.le.s32.totalorder 1, %s13
      %p130 = scmp.lt.s32.totalorder %s13, 3
      %p131 = pnand %p129, %p130
      %p132 = pneg %p131
      // Predicated region
      $region9: #{tpu_custom_call.1} parent=5 // pred_check
        _
      $region10: #{tpu_custom_call.1} parent=5 // pred_check_branch
        %134 = sbr.rel (%p131) target = $region12
      $region11: #{tpu_custom_call.1} parent=5 // pred_region
        %s135 = ssub.s32 %s13, 1
        // Predicated region
        $region13: #{tpu_custom_call.1} parent=11 // pred_check
          %p136 = pneg %p74
        $region14: #{tpu_custom_call.1} parent=11 // pred_check_branch
          %138 = sbr.rel (%p136) target = $region16
        $region15: #{tpu_custom_call.1} parent=11 // pred_region
          _
        $region16: #{tpu_custom_call.1} parent=11 // pred_fallthru
          _
        // Predicated region
        $region17: #{tpu_custom_call.1} parent=11 // pred_check
          %p139 = pneg %p95
        $region18: #{tpu_custom_call.1} parent=11 // pred_check_branch
          %141 = sbr.rel (%p139) target = $region20
        $region19: #{tpu_custom_call.1} parent=11 // pred_region
          _
        $region20: #{tpu_custom_call.1} parent=11 // pred_fallthru
          _
      $region12: #{tpu_custom_call.1} parent=5 // pred_fallthru
        _
      %p142 = scmp.lt.s32.totalorder %s13, 2
      // Predicated region
      $region21: #{tpu_custom_call.1} parent=5 // pred_check
        %p143 = pneg %p142
      $region22: #{tpu_custom_call.1} parent=5 // pred_check_branch
        %145 = sbr.rel (%p143) target = $region24
      $region23: #{tpu_custom_call.1} parent=5 // pred_region
        // Predicated region
        $region25: #{tpu_custom_call.1} parent=23 // pred_check
          %p146 = pneg %p47
        $region26: #{tpu_custom_call.1} parent=23 // pred_check_branch
          %148 = sbr.rel (%p146) target = $region28
        $region27: #{tpu_custom_call.1} parent=23 // pred_region
          %s149 = sand.u32 %s37, 1
          %s150 = scalar_lea.sflag [#allocation5], %s149
          %s151 = sand.u32 %s37, 1
          %s152 = smul.addr %s151, 128
          %s153 = scalar_lea.vmem [#allocation4], %s152
          %s154 = smul.u32 2, %s20
          %s156 = ssub.s32 2048, 2048
          %157 = vsyncadd %s150, %s156
          %s158 = smul.addr %s154, 16
          %s159 = sadd.s32 %s21, %s158
          %s160 = smul.addr %s159, 128
          %s161 = scalar_lea.hbm %s0, %s160
          %s162 = sshll.u32 %s153, 4
          %s163 = int_to_ptr.vmem [resolvable:$true] %s162
          %168 = dma.hbm_to_vmem [thread:$0]  %s161, 2048, %s163, %s150, 256, 128, 8
        $region28: #{tpu_custom_call.1} parent=23 // pred_fallthru
          _
      $region24: #{tpu_custom_call.1} parent=5 // pred_fallthru
        _
      %p169 = scmp.le.s32.totalorder 1, %s13
      %p170 = scmp.lt.s32.totalorder %s13, 3
      %p171 = pnand %p169, %p170
      %p172 = pneg %p171
      // Predicated region
      $region29: #{tpu_custom_call.1} parent=5 // pred_check
        _
      $region30: #{tpu_custom_call.1} parent=5 // pred_check_branch
        %174 = sbr.rel (%p171) target = $region32
      $region31: #{tpu_custom_call.1} parent=5 // pred_region
        %s175 = ssub.s32 %s13, 1
        %s176 = sand.u32 %s40, 1
        %s177 = scalar_lea.sflag [#allocation5], %s176
        %s178 = sand.u32 %s40, 1
        %s179 = smul.addr %s178, 128
        %s180 = scalar_lea.vmem [#allocation4], %s179
        // Predicated region
        $region33: #{tpu_custom_call.1} parent=31 // pred_check
          %p181 = pneg %p53
        $region34: #{tpu_custom_call.1} parent=31 // pred_check_branch
          %183 = sbr.rel (%p181) target = $region36
        $region35: #{tpu_custom_call.1} parent=31 // pred_region
          %184 = dma.done %s177, 2048
        $region36: #{tpu_custom_call.1} parent=31 // pred_fallthru
          _
        %s185 = sand.u32 %s40, 1
        %s186 = scalar_lea.sflag [#allocation5], %s185
        %s187 = sand.u32 %s40, 1
        %s188 = smul.addr %s187, 128
        %s189 = scalar_lea.vmem [#allocation4], %s188
        %p190 = pneg %p53
        %p191 = pneg %p50
        %p192 = pneg %p74
        %p193 = pneg %p71
        %p194 = pneg %p95
        %p195 = pneg %p92
        %p196 = pneg %p121
        %p197 = pneg %p118
        %s198 = smul.u32 2, %s22
        %p199 = scmp.eq.s32.totalorder %s23, 0
        // Predicated region
        $region37: #{tpu_custom_call.1} parent=31 // pred_check
          %p200 = pneg %p199
        $region38: #{tpu_custom_call.1} parent=31 // pred_check_branch
          %202 = sbr.rel (%p200) target = $region40
        $region39: #{tpu_custom_call.1} parent=31 // pred_region
          %203 = vst [vmem:[#allocation2] sm:$0xff] 0.0
          %204 = vst [vmem:[#allocation2 + $0x8] sm:$0xff] 0.0
          %205 = vst [vmem:[#allocation2 + $0x10] sm:$0xff] 0.0
          %206 = vst [vmem:[#allocation2 + $0x18] sm:$0xff] 0.0
          %207 = vst [vmem:[#allocation2 + $0x20] sm:$0xff] 0.0
          %208 = vst [vmem:[#allocation2 + $0x28] sm:$0xff] 0.0
          %209 = vst [vmem:[#allocation2 + $0x30] sm:$0xff] 0.0
          %210 = vst [vmem:[#allocation2 + $0x38] sm:$0xff] 0.0
          %211 = vst [vmem:[#allocation2 + $0x40] sm:$0xff] 0.0
          %212 = vst [vmem:[#allocation2 + $0x48] sm:$0xff] 0.0
          %213 = vst [vmem:[#allocation2 + $0x50] sm:$0xff] 0.0
          %214 = vst [vmem:[#allocation2 + $0x58] sm:$0xff] 0.0
          %215 = vst [vmem:[#allocation2 + $0x60] sm:$0xff] 0.0
          %216 = vst [vmem:[#allocation2 + $0x68] sm:$0xff] 0.0
          %217 = vst [vmem:[#allocation2 + $0x70] sm:$0xff] 0.0
          %218 = vst [vmem:[#allocation2 + $0x78] sm:$0xff] 0.0
          %219 = vst [vmem:[#allocation3] sm:$0xff] -inf
          %220 = vst [vmem:[#allocation3 + $0x8] sm:$0xff] -inf
          %221 = vst [vmem:[#allocation3 + $0x10] sm:$0xff] -inf
          %222 = vst [vmem:[#allocation3 + $0x18] sm:$0xff] -inf
          %223 = vst [vmem:[#allocation3 + $0x20] sm:$0xff] -inf
          %224 = vst [vmem:[#allocation3 + $0x28] sm:$0xff] -inf
          %225 = vst [vmem:[#allocation3 + $0x30] sm:$0xff] -inf
          %226 = vst [vmem:[#allocation3 + $0x38] sm:$0xff] -inf
          %227 = vst [vmem:[#allocation3 + $0x40] sm:$0xff] -inf
          %228 = vst [vmem:[#allocation3 + $0x48] sm:$0xff] -inf
          %229 = vst [vmem:[#allocation3 + $0x50] sm:$0xff] -inf
          %230 = vst [vmem:[#allocation3 + $0x58] sm:$0xff] -inf
          %231 = vst [vmem:[#allocation3 + $0x60] sm:$0xff] -inf
          %232 = vst [vmem:[#allocation3 + $0x68] sm:$0xff] -inf
          %233 = vst [vmem:[#allocation3 + $0x70] sm:$0xff] -inf
          %234 = vst [vmem:[#allocation3 + $0x78] sm:$0xff] -inf
        $region40: #{tpu_custom_call.1} parent=31 // pred_fallthru
          _
        %v235 = vld [vmem:[%s180] sm:$0xff]
        %v236 = vld [vmem:[%s180 + $0x8] sm:$0xff]
        %v237 = vld [vmem:[%s180 + $0x10] sm:$0xff]
        %v238 = vld [vmem:[%s180 + $0x18] sm:$0xff]
        %v239 = vld [vmem:[%s180 + $0x20] sm:$0xff]
        %v240 = vld [vmem:[%s180 + $0x28] sm:$0xff]
        %v241 = vld [vmem:[%s180 + $0x30] sm:$0xff]
        %v242 = vld [vmem:[%s180 + $0x38] sm:$0xff]
        %v243 = vld [vmem:[%s180 + $0x40] sm:$0xff]
        %v244 = vld [vmem:[%s180 + $0x48] sm:$0xff]
        %v245 = vld [vmem:[%s180 + $0x50] sm:$0xff]
        %v246 = vld [vmem:[%s180 + $0x58] sm:$0xff]
        %v247 = vld [vmem:[%s180 + $0x60] sm:$0xff]
        %v248 = vld [vmem:[%s180 + $0x68] sm:$0xff]
        %v249 = vld [vmem:[%s180 + $0x70] sm:$0xff]
        %v250 = vld [vmem:[%s180 + $0x78] sm:$0xff]
        %v251 = vld [vmem:[#allocation2] sm:$0xff]
        %v252 = vld [vmem:[#allocation2 + $0x8] sm:$0xff]
        %v253 = vld [vmem:[#allocation2 + $0x10] sm:$0xff]
        %v254 = vld [vmem:[#allocation2 + $0x18] sm:$0xff]
        %v255 = vld [vmem:[#allocation2 + $0x20] sm:$0xff]
        %v256 = vld [vmem:[#allocation2 + $0x28] sm:$0xff]
        %v257 = vld [vmem:[#allocation2 + $0x30] sm:$0xff]
        %v258 = vld [vmem:[#allocation2 + $0x38] sm:$0xff]
        %v259 = vld [vmem:[#allocation2 + $0x40] sm:$0xff]
        %v260 = vld [vmem:[#allocation2 + $0x48] sm:$0xff]
        %v261 = vld [vmem:[#allocation2 + $0x50] sm:$0xff]
        %v262 = vld [vmem:[#allocation2 + $0x58] sm:$0xff]
        %v263 = vld [vmem:[#allocation2 + $0x60] sm:$0xff]
        %v264 = vld [vmem:[#allocation2 + $0x68] sm:$0xff]
        %v265 = vld [vmem:[#allocation2 + $0x70] sm:$0xff]
        %v266 = vld [vmem:[#allocation2 + $0x78] sm:$0xff]
        %v267 = vadd.f32 %v251, %v235
        %v268 = vadd.f32 %v252, %v236
        %v269 = vadd.f32 %v253, %v237
        %v270 = vadd.f32 %v254, %v238
        %v271 = vadd.f32 %v255, %v239
        %v272 = vadd.f32 %v256, %v240
        %v273 = vadd.f32 %v257, %v241
        %v274 = vadd.f32 %v258, %v242
        %v275 = vadd.f32 %v259, %v243
        %v276 = vadd.f32 %v260, %v244
        %v277 = vadd.f32 %v261, %v245
        %v278 = vadd.f32 %v262, %v246
        %v279 = vadd.f32 %v263, %v247
        %v280 = vadd.f32 %v264, %v248
        %v281 = vadd.f32 %v265, %v249
        %v282 = vadd.f32 %v266, %v250
        %283 = vst [vmem:[#allocation2] sm:$0xff] %v267
        %284 = vst [vmem:[#allocation2 + $0x8] sm:$0xff] %v268
        %285 = vst [vmem:[#allocation2 + $0x10] sm:$0xff] %v269
        %286 = vst [vmem:[#allocation2 + $0x18] sm:$0xff] %v270
        %287 = vst [vmem:[#allocation2 + $0x20] sm:$0xff] %v271
        %288 = vst [vmem:[#allocation2 + $0x28] sm:$0xff] %v272
        %289 = vst [vmem:[#allocation2 + $0x30] sm:$0xff] %v273
        %290 = vst [vmem:[#allocation2 + $0x38] sm:$0xff] %v274
        %291 = vst [vmem:[#allocation2 + $0x40] sm:$0xff] %v275
        %292 = vst [vmem:[#allocation2 + $0x48] sm:$0xff] %v276
        %293 = vst [vmem:[#allocation2 + $0x50] sm:$0xff] %v277
        %294 = vst [vmem:[#allocation2 + $0x58] sm:$0xff] %v278
        %295 = vst [vmem:[#allocation2 + $0x60] sm:$0xff] %v279
        %296 = vst [vmem:[#allocation2 + $0x68] sm:$0xff] %v280
        %297 = vst [vmem:[#allocation2 + $0x70] sm:$0xff] %v281
        %298 = vst [vmem:[#allocation2 + $0x78] sm:$0xff] %v282
        %v299 = vld [vmem:[#allocation3] sm:$0xff]
        %v300 = vld [vmem:[#allocation3 + $0x8] sm:$0xff]
        %v301 = vld [vmem:[#allocation3 + $0x10] sm:$0xff]
        %v302 = vld [vmem:[#allocation3 + $0x18] sm:$0xff]
        %v303 = vld [vmem:[#allocation3 + $0x20] sm:$0xff]
        %v304 = vld [vmem:[#allocation3 + $0x28] sm:$0xff]
        %v305 = vld [vmem:[#allocation3 + $0x30] sm:$0xff]
        %v306 = vld [vmem:[#allocation3 + $0x38] sm:$0xff]
        %v307 = vld [vmem:[#allocation3 + $0x40] sm:$0xff]
        %v308 = vld [vmem:[#allocation3 + $0x48] sm:$0xff]
        %v309 = vld [vmem:[#allocation3 + $0x50] sm:$0xff]
        %v310 = vld [vmem:[#allocation3 + $0x58] sm:$0xff]
        %v311 = vld [vmem:[#allocation3 + $0x60] sm:$0xff]
        %v312 = vld [vmem:[#allocation3 + $0x68] sm:$0xff]
        %v313 = vld [vmem:[#allocation3 + $0x70] sm:$0xff]
        %v314 = vld [vmem:[#allocation3 + $0x78] sm:$0xff]
        %v315 = vmax.f32 %v299, %v235
        %v316 = vmax.f32 %v300, %v236
        %v317 = vmax.f32 %v301, %v237
        %v318 = vmax.f32 %v302, %v238
        %v319 = vmax.f32 %v303, %v239
        %v320 = vmax.f32 %v304, %v240
        %v321 = vmax.f32 %v305, %v241
        %v322 = vmax.f32 %v306, %v242
        %v323 = vmax.f32 %v307, %v243
        %v324 = vmax.f32 %v308, %v244
        %v325 = vmax.f32 %v309, %v245
        %v326 = vmax.f32 %v310, %v246
        %v327 = vmax.f32 %v311, %v247
        %v328 = vmax.f32 %v312, %v248
        %v329 = vmax.f32 %v313, %v249
        %v330 = vmax.f32 %v314, %v250
        %331 = vst [vmem:[#allocation3] sm:$0xff] %v315
        %332 = vst [vmem:[#allocation3 + $0x8] sm:$0xff] %v316
        %333 = vst [vmem:[#allocation3 + $0x10] sm:$0xff] %v317
        %334 = vst [vmem:[#allocation3 + $0x18] sm:$0xff] %v318
        %335 = vst [vmem:[#allocation3 + $0x20] sm:$0xff] %v319
        %336 = vst [vmem:[#allocation3 + $0x28] sm:$0xff] %v320
        %337 = vst [vmem:[#allocation3 + $0x30] sm:$0xff] %v321
        %338 = vst [vmem:[#allocation3 + $0x38] sm:$0xff] %v322
        %339 = vst [vmem:[#allocation3 + $0x40] sm:$0xff] %v323
        %340 = vst [vmem:[#allocation3 + $0x48] sm:$0xff] %v324
        %341 = vst [vmem:[#allocation3 + $0x50] sm:$0xff] %v325
        %342 = vst [vmem:[#allocation3 + $0x58] sm:$0xff] %v326
        %343 = vst [vmem:[#allocation3 + $0x60] sm:$0xff] %v327
        %344 = vst [vmem:[#allocation3 + $0x68] sm:$0xff] %v328
        %345 = vst [vmem:[#allocation3 + $0x70] sm:$0xff] %v329
        %346 = vst [vmem:[#allocation3 + $0x78] sm:$0xff] %v330
        %p347 = scmp.eq.s32.totalorder %s23, 1
        // Predicated region
        $region41: #{tpu_custom_call.1} parent=31 // pred_check
          %p348 = pneg %p347
        $region42: #{tpu_custom_call.1} parent=31 // pred_check_branch
          %350 = sbr.rel (%p348) target = $region44
        $region43: #{tpu_custom_call.1} parent=31 // pred_region
          %v351 = vld [vmem:[#allocation2] sm:$0xff]
          %v352 = vld [vmem:[#allocation2 + $0x8] sm:$0xff]
          %v353 = vld [vmem:[#allocation2 + $0x10] sm:$0xff]
          %v354 = vld [vmem:[#allocation2 + $0x18] sm:$0xff]
          %v355 = vld [vmem:[#allocation2 + $0x20] sm:$0xff]
          %v356 = vld [vmem:[#allocation2 + $0x28] sm:$0xff]
          %v357 = vld [vmem:[#allocation2 + $0x30] sm:$0xff]
          %v358 = vld [vmem:[#allocation2 + $0x38] sm:$0xff]
          %v359 = vld [vmem:[#allocation2 + $0x40] sm:$0xff]
          %v360 = vld [vmem:[#allocation2 + $0x48] sm:$0xff]
          %v361 = vld [vmem:[#allocation2 + $0x50] sm:$0xff]
          %v362 = vld [vmem:[#allocation2 + $0x58] sm:$0xff]
          %v363 = vld [vmem:[#allocation2 + $0x60] sm:$0xff]
          %v364 = vld [vmem:[#allocation2 + $0x68] sm:$0xff]
          %v365 = vld [vmem:[#allocation2 + $0x70] sm:$0xff]
          %v366 = vld [vmem:[#allocation2 + $0x78] sm:$0xff]
          %367 = vadd.xlane.f32.xlu0 %v351
          %v368 = vpop.xlane.xlu0 %367
          %369 = vadd.xlane.f32.xlu0 %v352
          %v370 = vpop.xlane.xlu0 %369
          %371 = vadd.xlane.f32.xlu0 %v353
          %v372 = vpop.xlane.xlu0 %371
          %373 = vadd.xlane.f32.xlu0 %v354
          %v374 = vpop.xlane.xlu0 %373
          %375 = vadd.xlane.f32.xlu0 %v355
          %v376 = vpop.xlane.xlu0 %375
          %377 = vadd.xlane.f32.xlu0 %v356
          %v378 = vpop.xlane.xlu0 %377
          %379 = vadd.xlane.f32.xlu0 %v357
          %v380 = vpop.xlane.xlu0 %379
          %381 = vadd.xlane.f32.xlu0 %v358
          %v382 = vpop.xlane.xlu0 %381
          %383 = vadd.xlane.f32.xlu0 %v359
          %v384 = vpop.xlane.xlu0 %383
          %385 = vadd.xlane.f32.xlu0 %v360
          %v386 = vpop.xlane.xlu0 %385
          %387 = vadd.xlane.f32.xlu0 %v361
          %v388 = vpop.xlane.xlu0 %387
          %389 = vadd.xlane.f32.xlu0 %v362
          %v390 = vpop.xlane.xlu0 %389
          %391 = vadd.xlane.f32.xlu0 %v363
          %v392 = vpop.xlane.xlu0 %391
          %393 = vadd.xlane.f32.xlu0 %v364
          %v394 = vpop.xlane.xlu0 %393
          %395 = vadd.xlane.f32.xlu0 %v365
          %v396 = vpop.xlane.xlu0 %395
          %397 = vadd.xlane.f32.xlu0 %v366
          %v398 = vpop.xlane.xlu0 %397
          %v399 = vmul.f32 %v368, 0.00390625
          %v400 = vmul.f32 %v370, 0.00390625
          %v401 = vmul.f32 %v372, 0.00390625
          %v402 = vmul.f32 %v374, 0.00390625
          %v403 = vmul.f32 %v376, 0.00390625
          %v404 = vmul.f32 %v378, 0.00390625
          %v405 = vmul.f32 %v380, 0.00390625
          %v406 = vmul.f32 %v382, 0.00390625
          %v407 = vmul.f32 %v384, 0.00390625
          %v408 = vmul.f32 %v386, 0.00390625
          %v409 = vmul.f32 %v388, 0.00390625
          %v410 = vmul.f32 %v390, 0.00390625
          %v411 = vmul.f32 %v392, 0.00390625
          %v412 = vmul.f32 %v394, 0.00390625
          %v413 = vmul.f32 %v396, 0.00390625
          %v414 = vmul.f32 %v398, 0.00390625
          %v415 = vld [vmem:[#allocation3] sm:$0xff]
          %v416 = vld [vmem:[#allocation3 + $0x8] sm:$0xff]
          %v417 = vld [vmem:[#allocation3 + $0x10] sm:$0xff]
          %v418 = vld [vmem:[#allocation3 + $0x18] sm:$0xff]
          %v419 = vld [vmem:[#allocation3 + $0x20] sm:$0xff]
          %v420 = vld [vmem:[#allocation3 + $0x28] sm:$0xff]
          %v421 = vld [vmem:[#allocation3 + $0x30] sm:$0xff]
          %v422 = vld [vmem:[#allocation3 + $0x38] sm:$0xff]
          %v423 = vld [vmem:[#allocation3 + $0x40] sm:$0xff]
          %v424 = vld [vmem:[#allocation3 + $0x48] sm:$0xff]
          %v425 = vld [vmem:[#allocation3 + $0x50] sm:$0xff]
          %v426 = vld [vmem:[#allocation3 + $0x58] sm:$0xff]
          %v427 = vld [vmem:[#allocation3 + $0x60] sm:$0xff]
          %v428 = vld [vmem:[#allocation3 + $0x68] sm:$0xff]
          %v429 = vld [vmem:[#allocation3 + $0x70] sm:$0xff]
          %v430 = vld [vmem:[#allocation3 + $0x78] sm:$0xff]
          %431 = vmax.xlane.f32.xlu0 %v415
          %v432 = vpop.xlane.xlu0 %431
          %433 = vmax.xlane.f32.xlu0 %v416
          %v434 = vpop.xlane.xlu0 %433
          %435 = vmax.xlane.f32.xlu0 %v417
          %v436 = vpop.xlane.xlu0 %435
          %437 = vmax.xlane.f32.xlu0 %v418
          %v438 = vpop.xlane.xlu0 %437
          %439 = vmax.xlane.f32.xlu0 %v419
          %v440 = vpop.xlane.xlu0 %439
          %441 = vmax.xlane.f32.xlu0 %v420
          %v442 = vpop.xlane.xlu0 %441
          %443 = vmax.xlane.f32.xlu0 %v421
          %v444 = vpop.xlane.xlu0 %443
          %445 = vmax.xlane.f32.xlu0 %v422
          %v446 = vpop.xlane.xlu0 %445
          %447 = vmax.xlane.f32.xlu0 %v423
          %v448 = vpop.xlane.xlu0 %447
          %449 = vmax.xlane.f32.xlu0 %v424
          %v450 = vpop.xlane.xlu0 %449
          %451 = vmax.xlane.f32.xlu0 %v425
          %v452 = vpop.xlane.xlu0 %451
          %453 = vmax.xlane.f32.xlu0 %v426
          %v454 = vpop.xlane.xlu0 %453
          %455 = vmax.xlane.f32.xlu0 %v427
          %v456 = vpop.xlane.xlu0 %455
          %457 = vmax.xlane.f32.xlu0 %v428
          %v458 = vpop.xlane.xlu0 %457
          %459 = vmax.xlane.f32.xlu0 %v429
          %v460 = vpop.xlane.xlu0 %459
          %461 = vmax.xlane.f32.xlu0 %v430
          %v462 = vpop.xlane.xlu0 %461
          %v479 = vlaneseq
          %v480 = vand.u32 %v479, 127
          %v481 = vlaneseq
          %v482 = vshrl.u32 %v481, 7
          %v483 = vsub.s32 %v480, %v482
          %v484 = vrot.slane %v399, %v483
          %v485 = vadd.s32 %v480, 4294967288
          %v486 = vlaneseq
          %v487 = vshrl.u32 %v486, 7
          %v488 = vsub.s32 %v485, %v487
          %v489 = vrot.slane %v400, %v488
          %vm490 = vcmask 130112
          %v491 = vsel %vm490, %v489, %v484
          %v492 = vadd.s32 %v480, 4294967280
          %v493 = vlaneseq
          %v494 = vshrl.u32 %v493, 7
          %v495 = vsub.s32 %v492, %v494
          %v496 = vrot.slane %v401, %v495
          %vm497 = vcmask 195712
          %v498 = vsel %vm497, %v496, %v491
          %v499 = vadd.s32 %v480, 4294967272
          %v500 = vlaneseq
          %v501 = vshrl.u32 %v500, 7
          %v502 = vsub.s32 %v499, %v501
          %v503 = vrot.slane %v402, %v502
          %vm504 = vcmask 261312
          %v505 = vsel %vm504, %v503, %v498
          %v506 = vadd.s32 %v480, 4294967264
          %v507 = vlaneseq
          %v508 = vshrl.u32 %v507, 7
          %v509 = vsub.s32 %v506, %v508
          %v510 = vrot.slane %v403, %v509
          %vm511 = vcmask 326912
          %v512 = vsel %vm511, %v510, %v505
          %v513 = vadd.s32 %v480, 4294967256
          %v514 = vlaneseq
          %v515 = vshrl.u32 %v514, 7
          %v516 = vsub.s32 %v513, %v515
          %v517 = vrot.slane %v404, %v516
          %vm518 = vcmask 392512
          %v519 = vsel %vm518, %v517, %v512
          %v520 = vadd.s32 %v480, 4294967248
          %v521 = vlaneseq
          %v522 = vshrl.u32 %v521, 7
          %v523 = vsub.s32 %v520, %v522
          %v524 = vrot.slane %v405, %v523
          %vm525 = vcmask 458112
          %v526 = vsel %vm525, %v524, %v519
          %v527 = vadd.s32 %v480, 4294967240
          %v528 = vlaneseq
          %v529 = vshrl.u32 %v528, 7
          %v530 = vsub.s32 %v527, %v529
          %v531 = vrot.slane %v406, %v530
          %vm532 = vcmask 523712
          %v533 = vsel %vm532, %v531, %v526
          %v534 = vlaneseq
          %v535 = vshrl.u32 %v534, 7
          %v536 = vsub.s32 %v480, %v535
          %v537 = vrot.slane %v407, %v536
          %v538 = vlaneseq
          %v539 = vshrl.u32 %v538, 7
          %v540 = vsub.s32 %v485, %v539
          %v541 = vrot.slane %v408, %v540
          %v542 = vsel %vm490, %v541, %v537
          %v543 = vlaneseq
          %v544 = vshrl.u32 %v543, 7
          %v545 = vsub.s32 %v492, %v544
          %v546 = vrot.slane %v409, %v545
          %v547 = vsel %vm497, %v546, %v542
          %v548 = vlaneseq
          %v549 = vshrl.u32 %v548, 7
          %v550 = vsub.s32 %v499, %v549
          %v551 = vrot.slane %v410, %v550
          %v552 = vsel %vm504, %v551, %v547
          %v553 = vlaneseq
          %v554 = vshrl.u32 %v553, 7
          %v555 = vsub.s32 %v506, %v554
          %v556 = vrot.slane %v411, %v555
          %v557 = vsel %vm511, %v556, %v552
          %v558 = vlaneseq
          %v559 = vshrl.u32 %v558, 7
          %v560 = vsub.s32 %v513, %v559
          %v561 = vrot.slane %v412, %v560
          %v562 = vsel %vm518, %v561, %v557
          %v563 = vlaneseq
          %v564 = vshrl.u32 %v563, 7
          %v565 = vsub.s32 %v520, %v564
          %v566 = vrot.slane %v413, %v565
          %v567 = vsel %vm525, %v566, %v562
          %v568 = vlaneseq
          %v569 = vshrl.u32 %v568, 7
          %v570 = vsub.s32 %v527, %v569
          %v571 = vrot.slane %v414, %v570
          %v572 = vsel %vm532, %v571, %v567
          %vm573 = vcmask 1041409
          %v574 = vsel %vm573, %v572, %v533
          %v592 = vlaneseq
          %v593 = vshrl.u32 %v592, 7
          %v594 = vsub.s32 %v480, %v593
          %v595 = vrot.slane %v432, %v594
          %v596 = vlaneseq
          %v597 = vshrl.u32 %v596, 7
          %v598 = vsub.s32 %v485, %v597
          %v599 = vrot.slane %v434, %v598
          %v600 = vsel %vm490, %v599, %v595
          %v601 = vlaneseq
          %v602 = vshrl.u32 %v601, 7
          %v603 = vsub.s32 %v492, %v602
          %v604 = vrot.slane %v436, %v603
          %v605 = vsel %vm497, %v604, %v600
          %v606 = vlaneseq
          %v607 = vshrl.u32 %v606, 7
          %v608 = vsub.s32 %v499, %v607
          %v609 = vrot.slane %v438, %v608
          %v610 = vsel %vm504, %v609, %v605
          %v611 = vlaneseq
          %v612 = vshrl.u32 %v611, 7
          %v613 = vsub.s32 %v506, %v612
          %v614 = vrot.slane %v440, %v613
          %v615 = vsel %vm511, %v614, %v610
          %v616 = vlaneseq
          %v617 = vshrl.u32 %v616, 7
          %v618 = vsub.s32 %v513, %v617
          %v619 = vrot.slane %v442, %v618
          %v620 = vsel %vm518, %v619, %v615
          %v621 = vlaneseq
          %v622 = vshrl.u32 %v621, 7
          %v623 = vsub.s32 %v520, %v622
          %v624 = vrot.slane %v444, %v623
          %v625 = vsel %vm525, %v624, %v620
          %v626 = vlaneseq
          %v627 = vshrl.u32 %v626, 7
          %v628 = vsub.s32 %v527, %v627
          %v629 = vrot.slane %v446, %v628
          %v630 = vsel %vm532, %v629, %v625
          %v631 = vlaneseq
          %v632 = vshrl.u32 %v631, 7
          %v633 = vsub.s32 %v480, %v632
          %v634 = vrot.slane %v448, %v633
          %v635 = vlaneseq
          %v636 = vshrl.u32 %v635, 7
          %v637 = vsub.s32 %v485, %v636
          %v638 = vrot.slane %v450, %v637
          %v639 = vsel %vm490, %v638, %v634
          %v640 = vlaneseq
          %v641 = vshrl.u32 %v640, 7
          %v642 = vsub.s32 %v492, %v641
          %v643 = vrot.slane %v452, %v642
          %v644 = vsel %vm497, %v643, %v639
          %v645 = vlaneseq
          %v646 = vshrl.u32 %v645, 7
          %v647 = vsub.s32 %v499, %v646
          %v648 = vrot.slane %v454, %v647
          %v649 = vsel %vm504, %v648, %v644
          %v650 = vlaneseq
          %v651 = vshrl.u32 %v650, 7
          %v652 = vsub.s32 %v506, %v651
          %v653 = vrot.slane %v456, %v652
          %v654 = vsel %vm511, %v653, %v649
          %v655 = vlaneseq
          %v656 = vshrl.u32 %v655, 7
          %v657 = vsub.s32 %v513, %v656
          %v658 = vrot.slane %v458, %v657
          %v659 = vsel %vm518, %v658, %v654
          %v660 = vlaneseq
          %v661 = vshrl.u32 %v660, 7
          %v662 = vsub.s32 %v520, %v661
          %v663 = vrot.slane %v460, %v662
          %v664 = vsel %vm525, %v663, %v659
          %v665 = vlaneseq
          %v666 = vshrl.u32 %v665, 7
          %v667 = vsub.s32 %v527, %v666
          %v668 = vrot.slane %v462, %v667
          %v669 = vsel %vm532, %v668, %v664
          %vm670 = vcmask 1043459
          %v671 = vsel %vm670, %v669, %v630
          %vm673 = vcmask 1041408
          %v674 = vsel %vm673, %v574, %v671
          %v675 = vld [vmem:[%s1] sm:$0xff]
          %v676 = vld [vmem:[%s1 + $0x8] sm:$0xff]
          %v677 = vld [vmem:[%s1 + $0x10] sm:$0xff]
          %v678 = vld [vmem:[%s1 + $0x18] sm:$0xff]
          %v679 = vld [vmem:[%s1 + $0x20] sm:$0xff]
          %v680 = vld [vmem:[%s1 + $0x28] sm:$0xff]
          %v681 = vld [vmem:[%s1 + $0x30] sm:$0xff]
          %v682 = vld [vmem:[%s1 + $0x38] sm:$0xff]
          %vm683 = vcmask 523264
          %v685 = vsel %vm683, %v674, 0
          %687 = vmatprep.subr.mxu0 0.0
          %688 = vmatpush1.msra.mxu0 0.0
          %689 = vmatprep.subr.mxu0 0.0
          %690 = vmatpush1.msra.mxu0 0.0
          %691 = vmatprep.subr.mxu0 0.0
          %692 = vmatpush1.msra.mxu0 0.0
          %693 = vmatprep.subr.mxu0 0.0
          %694 = vmatpush1.msra.mxu0 0.0
          %695 = vmatprep.subr.mxu0 0.0
          %696 = vmatpush1.msra.mxu0 0.0
          %697 = vmatprep.subr.mxu0 0.0
          %698 = vmatpush1.msra.mxu0 0.0
          %699 = vmatprep.subr.mxu0 0.0
          %700 = vmatpush1.msra.mxu0 0.0
          %701 = vmatprep.subr.mxu0 0.0
          %702 = vmatpush1.msra.mxu0 0.0
          %703 = vmatprep.subr.mxu0 0.0
          %704 = vmatpush1.msra.mxu0 %v682
          %705 = vmatprep.subr.mxu0 0.0
          %706 = vmatpush1.msra.mxu0 %v681
          %707 = vmatprep.subr.mxu0 0.0
          %708 = vmatpush1.msra.mxu0 %v680
          %709 = vmatprep.subr.mxu0 0.0
          %710 = vmatpush1.msra.mxu0 %v679
          %711 = vmatprep.subr.mxu0 0.0
          %712 = vmatpush1.msra.mxu0 %v678
          %713 = vmatprep.subr.mxu0 0.0
          %714 = vmatpush1.msra.mxu0 %v677
          %715 = vmatprep.subr.mxu0 0.0
          %716 = vmatpush1.msra.mxu0 %v676
          %717 = vmatprep.subr.mxu0 0.0
          %718 = vmatpush1.msra.mxu0 %v675
          %719 = vmatprep.subr.mxu0 0.0
          %720 = vmatpush2.msra.mxu0 0.0
          %721 = vmatprep.subr.mxu0 0.0
          %722 = vmatpush2.msra.mxu0 0.0
          %723 = vmatprep.subr.mxu0 0.0
          %724 = vmatpush2.msra.mxu0 0.0
          %725 = vmatprep.subr.mxu0 0.0
          %726 = vmatpush2.msra.mxu0 0.0
          %727 = vmatprep.subr.mxu0 0.0
          %728 = vmatpush2.msra.mxu0 0.0
          %729 = vmatprep.subr.mxu0 0.0
          %730 = vmatpush2.msra.mxu0 0.0
          %731 = vmatprep.subr.mxu0 0.0
          %732 = vmatpush2.msra.mxu0 0.0
          %733 = vmatprep.subr.mxu0 0.0
          %734 = vmatpush2.msra.mxu0 0.0
          %735 = vmatprep.subr.mxu0 0.0
          %736 = vmatpush2.msra.mxu0 0.0
          %737 = vmatprep.subr.mxu0 0.0
          %738 = vmatpush2.msra.mxu0 0.0
          %739 = vmatprep.subr.mxu0 0.0
          %740 = vmatpush2.msra.mxu0 0.0
          %741 = vmatprep.subr.mxu0 0.0
          %742 = vmatpush2.msra.mxu0 0.0
          %743 = vmatprep.subr.mxu0 0.0
          %744 = vmatpush2.msra.mxu0 0.0
          %745 = vmatprep.subr.mxu0 0.0
          %746 = vmatpush2.msra.mxu0 0.0
          %747 = vmatprep.subr.mxu0 0.0
          %748 = vmatpush2.msra.mxu0 0.0
          %749 = vmatprep.subr.mxu0 0.0
          %750 = vmatpush2.msra.mxu0 0.0
          %751 = vmatprep.mubr.f32.mxu0 0.0
          %752 = vmatmul.mubr.f32.gmra.mxu0 %v685
          %v753 = vpop.f32.mrf.mxu0
          %v754 = vadd.f32 0.0, %v753
          %v755 = vpop.f32.mrf.mxu0
          %756 = vdwg.mxu0
          %v757 = vmax.f32 %v754, 0.0
          %v758 = vld [vmem:[%s2] sm:$0xf]
          %vm759 = vcmask 31744
          %v761 = vsel %vm759, %v757, 0
          %vm763 = vcmask 1043456
          %v765 = vsel %vm763, %v758, 0
          %767 = vmatprep.subr.mxu0 0.0
          %768 = vmatpush1.msra.mxu0 0.0
          %769 = vmatprep.subr.mxu0 0.0
          %770 = vmatpush1.msra.mxu0 0.0
          %771 = vmatprep.subr.mxu0 0.0
          %772 = vmatpush1.msra.mxu0 0.0
          %773 = vmatprep.subr.mxu0 0.0
          %774 = vmatpush1.msra.mxu0 0.0
          %775 = vmatprep.subr.mxu0 0.0
          %776 = vmatpush1.msra.mxu0 0.0
          %777 = vmatprep.subr.mxu0 0.0
          %778 = vmatpush1.msra.mxu0 0.0
          %779 = vmatprep.subr.mxu0 0.0
          %780 = vmatpush1.msra.mxu0 0.0
          %781 = vmatprep.subr.mxu0 0.0
          %782 = vmatpush1.msra.mxu0 0.0
          %783 = vmatprep.subr.mxu0 0.0
          %784 = vmatpush1.msra.mxu0 0.0
          %785 = vmatprep.subr.mxu0 0.0
          %786 = vmatpush1.msra.mxu0 0.0
          %787 = vmatprep.subr.mxu0 0.0
          %788 = vmatpush1.msra.mxu0 0.0
          %789 = vmatprep.subr.mxu0 0.0
          %790 = vmatpush1.msra.mxu0 0.0
          %791 = vmatprep.subr.mxu0 0.0
          %792 = vmatpush1.msra.mxu0 0.0
          %793 = vmatprep.subr.mxu0 0.0
          %794 = vmatpush1.msra.mxu0 0.0
          %795 = vmatprep.subr.mxu0 0.0
          %796 = vmatpush1.msra.mxu0 0.0
          %797 = vmatprep.subr.mxu0 0.0
          %798 = vmatpush1.msra.mxu0 %v765
          %799 = vmatprep.subr.mxu0 0.0
          %800 = vmatpush2.msra.mxu0 0.0
          %801 = vmatprep.subr.mxu0 0.0
          %802 = vmatpush2.msra.mxu0 0.0
          %803 = vmatprep.subr.mxu0 0.0
          %804 = vmatpush2.msra.mxu0 0.0
          %805 = vmatprep.subr.mxu0 0.0
          %806 = vmatpush2.msra.mxu0 0.0
          %807 = vmatprep.subr.mxu0 0.0
          %808 = vmatpush2.msra.mxu0 0.0
          %809 = vmatprep.subr.mxu0 0.0
          %810 = vmatpush2.msra.mxu0 0.0
          %811 = vmatprep.subr.mxu0 0.0
          %812 = vmatpush2.msra.mxu0 0.0
          %813 = vmatprep.subr.mxu0 0.0
          %814 = vmatpush2.msra.mxu0 0.0
          %815 = vmatprep.subr.mxu0 0.0
          %816 = vmatpush2.msra.mxu0 0.0
          %817 = vmatprep.subr.mxu0 0.0
          %818 = vmatpush2.msra.mxu0 0.0
          %819 = vmatprep.subr.mxu0 0.0
          %820 = vmatpush2.msra.mxu0 0.0
          %821 = vmatprep.subr.mxu0 0.0
          %822 = vmatpush2.msra.mxu0 0.0
          %823 = vmatprep.subr.mxu0 0.0
          %824 = vmatpush2.msra.mxu0 0.0
          %825 = vmatprep.subr.mxu0 0.0
          %826 = vmatpush2.msra.mxu0 0.0
          %827 = vmatprep.subr.mxu0 0.0
          %828 = vmatpush2.msra.mxu0 0.0
          %829 = vmatprep.subr.mxu0 0.0
          %830 = vmatpush2.msra.mxu0 0.0
          %831 = vmatprep.mubr.f32.mxu0 0.0
          %832 = vmatmul.mubr.f32.gmra.mxu0 %v761
          %v833 = vpop.f32.mrf.mxu0
          %v834 = vadd.f32 0.0, %v833
          %v835 = vpop.f32.mrf.mxu0
          %836 = vdwg.mxu0
          %v838 = vrot.slane %v834, 2
          %v840 = vadd.f32 %v834, %v838
          %v841 = vxor.u32 %v840, 2147483648
          %v842 = vmul.f32 %v841, 1.442695
          %v843 = vpow.pop %v842
          %v844 = vadd.f32 %v843, 1.0
          %v845 = vrcp.pop %v844
          %v846 = vmul.f32 1.0, %v845
          %vm847 = vcmask 517120
          %848 = vst.msk [vmem:[#allocation7] sm:$0x3] %vm847, %v846
        $region44: #{tpu_custom_call.1} parent=31 // pred_fallthru
          _
        // Predicated region
        $region45: #{tpu_custom_call.1} parent=31 // pred_check
          %p849 = pneg %p118
        $region46: #{tpu_custom_call.1} parent=31 // pred_check_branch
          %851 = sbr.rel (%p849) target = $region48
        $region47: #{tpu_custom_call.1} parent=31 // pred_region
          %s853 = ssub.s32 32, 32
          %854 = vsyncadd [#allocation6], %s853
          %s855 = smul.addr %s22, 32
          %s856 = scalar_lea.hbm %s3, %s855
          %s858 = sshll.u32 [#allocation7], 4
          %s859 = int_to_ptr.vmem [resolvable:$true] %s858
          %861 = dma.vmem_to_hbm [thread:$0]  %s859, 32, %s856, [#allocation6]
        $region48: #{tpu_custom_call.1} parent=31 // pred_fallthru
          _
        // Predicated region
        $region49: #{tpu_custom_call.1} parent=31 // pred_check
          %p862 = pneg %p118
        $region50: #{tpu_custom_call.1} parent=31 // pred_check_branch
          %864 = sbr.rel (%p862) target = $region52
        $region51: #{tpu_custom_call.1} parent=31 // pred_region
          %865 = dma.done [#allocation6], 32
        $region52: #{tpu_custom_call.1} parent=31 // pred_fallthru
          _
      $region32: #{tpu_custom_call.1} parent=5 // pred_fallthru
        _
      %p866 = scmp.le.s32.totalorder 2, %s13
      // Predicated region
      $region53: #{tpu_custom_call.1} parent=5 // pred_check
        %p867 = pneg %p866
      $region54: #{tpu_custom_call.1} parent=5 // pred_check_branch
        %869 = sbr.rel (%p867) target = $region56
      $region55: #{tpu_custom_call.1} parent=5 // pred_region
        %s870 = ssub.s32 %s13, 2
      $region56: #{tpu_custom_call.1} parent=5 // pred_fallthru
        _
    $region6: #{tpu_custom_call.1} parent=1 // loop_footer
      %s17 = sadd.s32 1, %s13
    $region7: #{tpu_custom_call.1} parent=1 // loop_footer_branch
      %12 = sbr.rel target = $region3
    $region8: #{tpu_custom_call.1} parent=1 // loop_exit
      _
    %871 = vsyncpa [#allocation5], 1
    %s872 = scalar_lea.sflag [#allocation5], 1
    %873 = vsyncpa %s872, 1
    %874 = vsyncpa [#allocation6], 1
    %s875 = scalar_lea.sflag [#allocation6], 1
    %876 = vsyncpa %s875, 1

</llo_original>
